<compile_context>
chip_gen: v5e
topology: v5e:2x2
jax: 0.10.0
libtpu: 0.0.40
codegen_flags: <defaults>
</compile_context>

<pallas_src>
import jax
import jax.numpy as jnp
from jax.experimental import pallas as pl
from jax.experimental.pallas import tpu as pltpu

HIDDEN = 128
SUBLANE = 8


def _round_up(x, m):
    return (x + m - 1) // m * m


# ---------------------------------------------------------------------------
# Kernel
# ---------------------------------------------------------------------------
def _mlp_kernel(x_ref, w1_ref, w2_ref, w3_ref, b1_ref, b2_ref, b3_ref, o_ref):
    # x_ref:  (tm, in_dim)   f32  -- batch tile (cast to bf16 in-kernel)
    # w1_ref: (in_dim, 128)  bf16
    # w2_ref: (128, 128)     bf16
    # w3_ref: (128, out_dim) bf16
    # b*_ref: (1, 128)/(1, 128)/(1, out_dim) f32
    # o_ref:  (tm, out_dim)  f32
    x = x_ref[...].astype(w1_ref.dtype)

    # fc1 + ReLU (bf16 matmul, f32 accumulate, f32 elementwise)
    h1 = jnp.dot(x, w1_ref[...], preferred_element_type=jnp.float32) + b1_ref[...]
    h1 = jnp.maximum(h1, 0.0)

    # fc2 + ReLU
    h2 = jnp.dot(h1.astype(w2_ref.dtype), w2_ref[...],
                 preferred_element_type=jnp.float32) + b2_ref[...]
    h2 = jnp.maximum(h2, 0.0)

    # fc3 (no activation)
    out = jnp.dot(h2.astype(w3_ref.dtype), w3_ref[...],
                  preferred_element_type=jnp.float32) + b3_ref[...]
    o_ref[...] = out.astype(o_ref.dtype)


# ---------------------------------------------------------------------------
# One-time parameter preparation (hoisted out of the forward pass)
# ---------------------------------------------------------------------------
def prepare_params(params, compute_dtype=jnp.bfloat16):
    """PyTorch-layout params -> kernel layout: (in, out) bf16 weights,
    f32 bias rows.  No lane padding needed (output block == full last dim)."""
    w1 = params["fc1_w"].T.astype(compute_dtype)            # (in, 128)
    w2 = params["fc2_w"].T.astype(compute_dtype)            # (128, 128)
    w3 = params["fc3_w"].T.astype(compute_dtype)            # (128, out_dim)
    b1 = params["fc1_b"].astype(jnp.float32)[None, :]       # (1, 128)
    b2 = params["fc2_b"].astype(jnp.float32)[None, :]       # (1, 128)
    b3 = params["fc3_b"].astype(jnp.float32)[None, :]       # (1, out_dim)
    return {"w1": w1, "w2": w2, "w3": w3, "b1": b1, "b2": b2, "b3": b3,
            "out_dim": int(w3.shape[1])}


# ---------------------------------------------------------------------------
# Forward wrapper
# ---------------------------------------------------------------------------
def map_critic_forward(x, prepared, *, block_rows=1024):
    """x: (B, input_dim) f32; prepared: output of prepare_params()."""
    B, in_dim = x.shape
    w1, w2, w3 = prepared["w1"], prepared["w2"], prepared["w3"]
    b1, b2, b3 = prepared["b1"], prepared["b2"], prepared["b3"]
    out_dim = prepared["out_dim"]

    # Batch tile: multiple of 8 sublanes, capped at block_rows, and sized so
    # that B > 8 yields at least 2 grid steps (both TCs busy on v7x).
    tm = min(block_rows, _round_up(max(pl.cdiv(B, 2), 1), SUBLANE))
    tm = max(tm, SUBLANE)
    nb = pl.cdiv(B, tm)          # ragged last block handled by Pallas masking

    flops = 2 * B * (in_dim * HIDDEN + HIDDEN * HIDDEN + HIDDEN * out_dim)
    weight_bytes = (w1.size * w1.dtype.itemsize
                    + w2.size * w2.dtype.itemsize
                    + w3.size * w3.dtype.itemsize
                    + (b1.size + b2.size + b3.size) * 4)
    bytes_accessed = B * in_dim * x.dtype.itemsize + weight_bytes + B * out_dim * 4

    out = pl.pallas_call(
        _mlp_kernel,
        out_shape=jax.ShapeDtypeStruct((B, out_dim), jnp.float32),
        grid=(nb,),
        in_specs=[
            pl.BlockSpec((tm, in_dim), lambda i: (i, 0)),        # x tile (f32)
            pl.BlockSpec((in_dim, HIDDEN), lambda i: (0, 0)),    # w1 (resident)
            pl.BlockSpec((HIDDEN, HIDDEN), lambda i: (0, 0)),    # w2 (resident)
            pl.BlockSpec((HIDDEN, out_dim), lambda i: (0, 0)),   # w3 (resident)
            pl.BlockSpec((1, HIDDEN), lambda i: (0, 0)),         # b1 (resident)
            pl.BlockSpec((1, HIDDEN), lambda i: (0, 0)),         # b2 (resident)
            pl.BlockSpec((1, out_dim), lambda i: (0, 0)),        # b3 (resident)
        ],
        out_specs=pl.BlockSpec((tm, out_dim), lambda i: (i, 0)),
        compiler_params=pltpu.CompilerParams(
            dimension_semantics=("parallel",),
            vmem_limit_bytes=32 << 20),
        cost_estimate=pl.CostEstimate(
            flops=int(flops), transcendentals=0,
            bytes_accessed=int(bytes_accessed)),
    )(x, w1, w2, w3, b1, b2, b3)

    return out


# ---------------------------------------------------------------------------
# Init + references
# ---------------------------------------------------------------------------
def init_params(key, input_dim, output_dim, hidden=HIDDEN):
    """Deterministic init mimicking nn.Linear default (uniform +/- 1/sqrt(fan_in)),
    stored in PyTorch layout (out, in)."""
    ks = jax.random.split(key, 6)

    def lin(kw, kb, fan_in, fan_out):
        bound = 1.0 / jnp.sqrt(fan_in)
        w = jax.random.uniform(kw, (fan_out, fan_in), jnp.float32, -bound, bound)
        bvec = jax.random.uniform(kb, (fan_out,), jnp.float32, -bound, bound)
        return w, bvec

    w1, b1 = lin(ks[0], ks[1], input_dim, hidden)
    w2, b2 = lin(ks[2], ks[3], hidden, hidden)
    w3, b3 = lin(ks[4], ks[5], hidden, output_dim)
    return {
        "fc1_w": w1, "fc1_b": b1,
        "fc2_w": w2, "fc2_b": b2,
        "fc3_w": w3, "fc3_b": b3,
    }


def _reference_f32(x, p):
    h = jnp.maximum(x @ p["fc1_w"].T + p["fc1_b"], 0.0)
    h = jnp.maximum(h @ p["fc2_w"].T + p["fc2_b"], 0.0)
    return h @ p["fc3_w"].T + p["fc3_b"]


def _reference_bf16(x, p):
    """Same numerics as the kernel: bf16 operands, f32 accumulation."""
    bf = jnp.bfloat16
    h = jnp.dot(x.astype(bf), p["fc1_w"].T.astype(bf),
                preferred_element_type=jnp.float32) + p["fc1_b"]
    h = jnp.maximum(h, 0.0)
    h = jnp.dot(h.astype(bf), p["fc2_w"].T.astype(bf),
                preferred_element_type=jnp.float32) + p["fc2_b"]
    h = jnp.maximum(h, 0.0)
    return jnp.dot(h.astype(bf), p["fc3_w"].T.astype(bf),
                   preferred_element_type=jnp.float32) + p["fc3_b"]


if __name__ == "__main__":
    key = jax.random.PRNGKey(0)
    k_x, k_p, k_x2 = jax.random.split(key, 3)

    input_dim = 32
    output_dim = 4

    params = init_params(k_p, input_dim, output_dim)
    prepared = prepare_params(params)

    # Small batch (single grid step).
    batch = 8
    x = jax.random.normal(k_x, (batch, input_dim), jnp.float32)
    out = jax.block_until_ready(map_critic_forward(x, prepared))
    assert out.shape == (batch, output_dim)
    assert jnp.allclose(out, _reference_bf16(x, params), atol=1e-2, rtol=1e-2)
    assert jnp.allclose(out, _reference_f32(x, params), atol=1e-1, rtol=1e-1)

    # Larger, non-tile-multiple batch to exercise the ragged-grid (masked
    # partial last block) path.
    batch2 = 300
    x2 = jax.random.normal(k_x2, (batch2, input_dim), jnp.float32)
    out2 = jax.block_until_ready(map_critic_forward(x2, prepared))
    assert out2.shape == (batch2, output_dim)
    assert jnp.allclose(out2, _reference_bf16(x2, params), atol=1e-2, rtol=1e-2)
    assert jnp.allclose(out2, _reference_f32(x2, params), atol=1e-1, rtol=1e-1)

    print("KERNEL_OK")
</pallas_src>

<mosaic_0001>
module attributes {stable_mosaic.version = 11 : i64} {
  func.func @_mlp_kernel(%arg0: i32, %arg1: memref<8x32xf32, #tpu.memory_space<vmem>>, %arg2: memref<32x128xbf16, #tpu.memory_space<vmem>>, %arg3: memref<128x128xbf16, #tpu.memory_space<vmem>>, %arg4: memref<128x4xbf16, #tpu.memory_space<vmem>>, %arg5: memref<1x128xf32, #tpu.memory_space<vmem>>, %arg6: memref<1x128xf32, #tpu.memory_space<vmem>>, %arg7: memref<1x4xf32, #tpu.memory_space<vmem>>, %arg8: memref<8x4xf32, #tpu.memory_space<vmem>>) attributes {dimension_semantics = [#tpu.dimension_semantics<parallel>], iteration_bounds = array<i64: 1>, scalar_prefetch = 0 : i64, scratch_operands = 0 : i64, tpu.core_type = #tpu.core_type<tc>, window_params = [{transform_indices = @transform_0, window_bounds = array<i64: 8, 32>}, {pipeline_mode = #tpu.pipeline_mode<synchronous>, transform_indices = @transform_1, window_bounds = array<i64: 32, 128>}, {pipeline_mode = #tpu.pipeline_mode<synchronous>, transform_indices = @transform_2, window_bounds = array<i64: 128, 128>}, {pipeline_mode = #tpu.pipeline_mode<synchronous>, transform_indices = @transform_3, window_bounds = array<i64: 128, 4>}, {pipeline_mode = #tpu.pipeline_mode<synchronous>, transform_indices = @transform_4, window_bounds = array<i64: 1, 128>}, {pipeline_mode = #tpu.pipeline_mode<synchronous>, transform_indices = @transform_5, window_bounds = array<i64: 1, 128>}, {pipeline_mode = #tpu.pipeline_mode<synchronous>, transform_indices = @transform_6, window_bounds = array<i64: 1, 4>}, {transform_indices = @transform_7, window_bounds = array<i64: 8, 4>}]} {
    %c0 = arith.constant 0 : index
    %c0_0 = arith.constant 0 : index
    %0 = vector.load %arg1[%c0, %c0_0] : memref<8x32xf32, #tpu.memory_space<vmem>>, vector<8x32xf32>
    %1 = arith.truncf %0 : vector<8x32xf32> to vector<8x32xbf16>
    %c0_1 = arith.constant 0 : index
    %c0_2 = arith.constant 0 : index
    %2 = vector.load %arg2[%c0_1, %c0_2] : memref<32x128xbf16, #tpu.memory_space<vmem>>, vector<32x128xbf16>
    %cst = arith.constant dense<0.000000e+00> : vector<8x128xf32>
    %3 = tpu.matmul %1, %2, %cst {dimension_numbers = #tpu.dot_dimension_numbers<[1], [0], [0], [1], [0, 0, 1, 1], [], []>} : vector<8x32xbf16>, vector<32x128xbf16>, vector<8x128xf32> -> vector<8x128xf32>
    %c0_3 = arith.constant 0 : index
    %c0_4 = arith.constant 0 : index
    %4 = vector.load %arg5[%c0_3, %c0_4] : memref<1x128xf32, #tpu.memory_space<vmem>>, vector<1x128xf32>
    %5 = vector.broadcast %4 : vector<1x128xf32> to vector<8x128xf32>
    %6 = arith.addf %3, %5 : vector<8x128xf32>
    %cst_5 = arith.constant 0.000000e+00 : f32
    %7 = vector.broadcast %cst_5 : f32 to vector<8x128xf32>
    %8 = arith.maximumf %6, %7 : vector<8x128xf32>
    %9 = arith.truncf %8 : vector<8x128xf32> to vector<8x128xbf16>
    %c0_6 = arith.constant 0 : index
    %c0_7 = arith.constant 0 : index
    %10 = vector.load %arg3[%c0_6, %c0_7] : memref<128x128xbf16, #tpu.memory_space<vmem>>, vector<128x128xbf16>
    %cst_8 = arith.constant dense<0.000000e+00> : vector<8x128xf32>
    %11 = tpu.matmul %9, %10, %cst_8 {dimension_numbers = #tpu.dot_dimension_numbers<[1], [0], [0], [1], [0, 0, 1, 1], [], []>} : vector<8x128xbf16>, vector<128x128xbf16>, vector<8x128xf32> -> vector<8x128xf32>
    %c0_9 = arith.constant 0 : index
    %c0_10 = arith.constant 0 : index
    %12 = vector.load %arg6[%c0_9, %c0_10] : memref<1x128xf32, #tpu.memory_space<vmem>>, vector<1x128xf32>
    %13 = vector.broadcast %12 : vector<1x128xf32> to vector<8x128xf32>
    %14 = arith.addf %11, %13 : vector<8x128xf32>
    %cst_11 = arith.constant 0.000000e+00 : f32
    %15 = vector.broadcast %cst_11 : f32 to vector<8x128xf32>
    %16 = arith.maximumf %14, %15 : vector<8x128xf32>
    %17 = arith.truncf %16 : vector<8x128xf32> to vector<8x128xbf16>
    %c0_12 = arith.constant 0 : index
    %c0_13 = arith.constant 0 : index
    %18 = vector.load %arg4[%c0_12, %c0_13] : memref<128x4xbf16, #tpu.memory_space<vmem>>, vector<128x4xbf16>
    %cst_14 = arith.constant dense<0.000000e+00> : vector<8x4xf32>
    %19 = tpu.matmul %17, %18, %cst_14 {dimension_numbers = #tpu.dot_dimension_numbers<[1], [0], [0], [1], [0, 0, 1, 1], [], []>} : vector<8x128xbf16>, vector<128x4xbf16>, vector<8x4xf32> -> vector<8x4xf32>
    %c0_15 = arith.constant 0 : index
    %c0_16 = arith.constant 0 : index
    %20 = vector.load %arg7[%c0_15, %c0_16] : memref<1x4xf32, #tpu.memory_space<vmem>>, vector<1x4xf32>
    %21 = vector.broadcast %20 : vector<1x4xf32> to vector<8x4xf32>
    %22 = arith.addf %19, %21 : vector<8x4xf32>
    %c0_17 = arith.constant 0 : index
    %c0_18 = arith.constant 0 : index
    %23 = vector.load %arg8[%c0_17, %c0_18] : memref<8x4xf32, #tpu.memory_space<vmem>>, vector<8x4xf32>
    tpu.vector_store %arg8[%c0_17, %c0_18], %22 {strides = array<i32>} : memref<8x4xf32, #tpu.memory_space<vmem>>, vector<8x4xf32>,
    return
  }
  func.func @transform_0(%arg0: i32) -> (i32, i32) {
    %c0_i32 = arith.constant 0 : i32
    %c0_i32_0 = arith.constant 0 : i32
    return %arg0, %c0_i32 : i32, i32
  }
  func.func @transform_1(%arg0: i32) -> (i32, i32) {
    %c0_i32 = arith.constant 0 : i32
    %c0_i32_0 = arith.constant 0 : i32
    %c0_i32_1 = arith.constant 0 : i32
    return %c0_i32, %c0_i32_0 : i32, i32
  }
  func.func @transform_2(%arg0: i32) -> (i32, i32) {
    %c0_i32 = arith.constant 0 : i32
    %c0_i32_0 = arith.constant 0 : i32
    %c0_i32_1 = arith.constant 0 : i32
    return %c0_i32, %c0_i32_0 : i32, i32
  }
  func.func @transform_3(%arg0: i32) -> (i32, i32) {
    %c0_i32 = arith.constant 0 : i32
    %c0_i32_0 = arith.constant 0 : i32
    %c0_i32_1 = arith.constant 0 : i32
    return %c0_i32, %c0_i32_0 : i32, i32
  }
  func.func @transform_4(%arg0: i32) -> (i32, i32) {
    %c0_i32 = arith.constant 0 : i32
    %c0_i32_0 = arith.constant 0 : i32
    %c0_i32_1 = arith.constant 0 : i32
    return %c0_i32, %c0_i32_0 : i32, i32
  }
  func.func @transform_5(%arg0: i32) -> (i32, i32) {
    %c0_i32 = arith.constant 0 : i32
    %c0_i32_0 = arith.constant 0 : i32
    %c0_i32_1 = arith.constant 0 : i32
    return %c0_i32, %c0_i32_0 : i32, i32
  }
  func.func @transform_6(%arg0: i32) -> (i32, i32) {
    %c0_i32 = arith.constant 0 : i32
    %c0_i32_0 = arith.constant 0 : i32
    %c0_i32_1 = arith.constant 0 : i32
    return %c0_i32, %c0_i32_0 : i32, i32
  }
  func.func @transform_7(%arg0: i32) -> (i32, i32) {
    %c0_i32 = arith.constant 0 : i32
    %c0_i32_0 = arith.constant 0 : i32
    return %arg0, %c0_i32 : i32, i32
  }
}

</mosaic_0001>

<llo_original>
// kernel: tpu_custom_call.1
$region0: #{tpu_custom_call.1}
  #allocation0 [shape = 'u32[]', space=smem, size = 0x4, offset = 0x4, fixed_abs, tag = 'smem constant byte address 0x4 - core index']
  #allocation1 [shape = 'u32[72,128]{1,0:T(1,128)}', space=vmem, size = 0x9000, scoped, tag = 'internal scratch']
  %s0 = inlined_call_operand.hbm [shape: f32[8,32], index: 0, kind: input, shape index: {}]
  %s1 = inlined_call_operand.hbm [shape: bf16[32,128], index: 1, kind: input, shape index: {}]
  %s2 = inlined_call_operand.vmem [shape: bf16[128,128], index: 2, kind: input, shape index: {}]
  %s3 = inlined_call_operand.vmem [shape: bf16[128,4], index: 3, kind: input, shape index: {}]
  %s4 = inlined_call_operand.vmem [shape: f32[1,128], index: 4, kind: input, shape index: {}]
  %s5 = inlined_call_operand.vmem [shape: f32[1,128], index: 5, kind: input, shape index: {}]
  %s6 = inlined_call_operand.vmem [shape: f32[1,4], index: 6, kind: input, shape index: {}]
  %s7 = inlined_call_operand.vmem [shape: f32[8,4], index: 7, kind: output, shape index: {}]
  %s8 = sld [smem:[#allocation0]]
  $region46: #{tpu_custom_call.1} parent=0
    _
  %s10 = ssub.s32 1, %s8
  %s11 = scalar_select 0, %s10, %s8
  $region1: #{tpu_custom_call.1} parent=0
    #allocation2 [shape = 'u8[4096]{0}', space=vmem, size = 0x1000, scoped, tag = 'input window, operand 0, single buffered']
    #allocation3 [shape = 's32[1]{0}', space=sflag, size = 0x4, scoped, tag = 'scoped memory for tpu_custom_call.1']
    #allocation4 [shape = 'u8[8192]{0}', space=vmem, size = 0x2000, scoped, tag = 'input window, operand 1, single buffered']
    #allocation5 [shape = 's32[1]{0}', space=sflag, size = 0x4, scoped, tag = 'scoped memory for tpu_custom_call.1']
    %12 = vsyncpa [#allocation3], 0
    %13 = vsyncpa [#allocation5], 0
    // Predicated region
    $region2: #{tpu_custom_call.1} parent=1 // pred_check
      _
    $region3: #{tpu_custom_call.1} parent=1 // pred_check_branch
      %15 = sbr.rel (0) target = $region5
    $region4: #{tpu_custom_call.1} parent=1 // pred_region
      %17 = vsyncadd [#allocation3], 0
      %s19 = sshll.u32 %s0, 4
      %s20 = int_to_ptr.hbm [resolvable:$true] %s19
      %s21 = sshll.u32 [#allocation2], 4
      %s22 = int_to_ptr.vmem [resolvable:$true] %s21
      %24 = dma.hbm_to_vmem [thread:$0]  %s20, 128, %s22, [#allocation3]
    $region5: #{tpu_custom_call.1} parent=1 // pred_fallthru
      _
    // Predicated region
    $region6: #{tpu_custom_call.1} parent=1 // pred_check
      _
    $region7: #{tpu_custom_call.1} parent=1 // pred_check_branch
      %26 = sbr.rel (0) target = $region9
    $region8: #{tpu_custom_call.1} parent=1 // pred_region
      %28 = vsyncadd [#allocation5], 0
      %s29 = sshll.u32 %s1, 4
      %s30 = int_to_ptr.hbm [resolvable:$true] %s29
      %s31 = sshll.u32 [#allocation4], 4
      %s32 = int_to_ptr.vmem [resolvable:$true] %s31
      %37 = dma.hbm_to_vmem [thread:$0]  %s30, 256, %s32, [#allocation5], 64, 64, 4
    $region9: #{tpu_custom_call.1} parent=1 // pred_fallthru
      _
    // Predicated region
    $region10: #{tpu_custom_call.1} parent=1 // pred_check
      _
    $region11: #{tpu_custom_call.1} parent=1 // pred_check_branch
      %39 = sbr.rel (0) target = $region13
    $region12: #{tpu_custom_call.1} parent=1 // pred_region
      _
    $region13: #{tpu_custom_call.1} parent=1 // pred_fallthru
      _
    // Predicated region
    $region14: #{tpu_custom_call.1} parent=1 // pred_check
      _
    $region15: #{tpu_custom_call.1} parent=1 // pred_check_branch
      %41 = sbr.rel (0) target = $region17
    $region16: #{tpu_custom_call.1} parent=1 // pred_region
      _
    $region17: #{tpu_custom_call.1} parent=1 // pred_fallthru
      _
    // Predicated region
    $region18: #{tpu_custom_call.1} parent=1 // pred_check
      _
    $region19: #{tpu_custom_call.1} parent=1 // pred_check_branch
      %43 = sbr.rel (0) target = $region21
    $region20: #{tpu_custom_call.1} parent=1 // pred_region
      _
    $region21: #{tpu_custom_call.1} parent=1 // pred_fallthru
      _
    // Predicated region
    $region22: #{tpu_custom_call.1} parent=1 // pred_check
      _
    $region23: #{tpu_custom_call.1} parent=1 // pred_check_branch
      %45 = sbr.rel (0) target = $region25
    $region24: #{tpu_custom_call.1} parent=1 // pred_region
      _
    $region25: #{tpu_custom_call.1} parent=1 // pred_fallthru
      _
    // Predicated region
    $region26: #{tpu_custom_call.1} parent=1 // pred_check
      _
    $region27: #{tpu_custom_call.1} parent=1 // pred_check_branch
      %47 = sbr.rel (0) target = $region29
    $region28: #{tpu_custom_call.1} parent=1 // pred_region
      _
    $region29: #{tpu_custom_call.1} parent=1 // pred_fallthru
      _
    // Predicated region
    $region30: #{tpu_custom_call.1} parent=1 // pred_check
      _
    $region31: #{tpu_custom_call.1} parent=1 // pred_check_branch
      %49 = sbr.rel (0) target = $region33
    $region32: #{tpu_custom_call.1} parent=1 // pred_region
      %51 = dma.done [#allocation3], 128
    $region33: #{tpu_custom_call.1} parent=1 // pred_fallthru
      _
    // Predicated region
    $region34: #{tpu_custom_call.1} parent=1 // pred_check
      _
    $region35: #{tpu_custom_call.1} parent=1 // pred_check_branch
      %53 = sbr.rel (0) target = $region37
    $region36: #{tpu_custom_call.1} parent=1 // pred_region
      %55 = dma.done [#allocation5], 256
    $region37: #{tpu_custom_call.1} parent=1 // pred_fallthru
      _
    %v57 = vld [vmem:[#allocation2] sm:$0xff]
    %v58 = vpack.c.bf16 %v57, %v57
    %v59 = vld [vmem:[#allocation4] sm:$0xf]
    %v60 = vld [vmem:[#allocation4 + $0x4] sm:$0xf]
    %v61 = vld [vmem:[#allocation4 + $0x8] sm:$0xf]
    %v62 = vld [vmem:[#allocation4 + $0xc] sm:$0xf]
    %v63 = vld [vmem:[%s4] sm:$0x1]
    %v65 = vperm.slane %v63, 0
    %v71 = vunpack.c.l.b16 %v59
    %v72 = vunpack.c.l.b16 %v60
    %v73 = vunpack.c.l.b16 %v61
    %v74 = vunpack.c.l.b16 %v62
    %v75 = vpack.c.b16 %v72, %v71
    %v76 = vpack.c.b16 %v74, %v73
    %vm79 = vcmask 261120
    %v81 = vsel %vm79, %v58, 0
    %83 = vmatpush.bf16.msra.mxu0 0
    %84 = vmatpush.bf16.msra.mxu0 0
    %85 = vmatpush.bf16.msra.mxu0 0
    %86 = vmatpush.bf16.msra.mxu0 0
    %87 = vmatpush.bf16.msra.mxu0 0
    %88 = vmatpush.bf16.msra.mxu0 0
    %89 = vmatpush.bf16.msra.mxu0 %v76
    %90 = vmatpush.bf16.msra.mxu0 %v75
    %91 = vmatmul.bf16.gmra.mxu0 %v81
    %v92 = vpop.f32.mrf.mxu0
    %v93 = vadd.f32 %v65, %v92
    %v94 = vpop.f32.mrf.mxu0
    %95 = vdwg.mxu0
    %v96 = vmax.f32 %v93, 0.0
    %v97 = vpack.c.bf16 %v96, %v96
    %v98 = vld [vmem:[%s2] sm:$0xf]
    %v99 = vld [vmem:[%s2 + $0x4] sm:$0xf]
    %v100 = vld [vmem:[%s2 + $0x8] sm:$0xf]
    %v101 = vld [vmem:[%s2 + $0xc] sm:$0xf]
    %v102 = vld [vmem:[%s2 + $0x10] sm:$0xf]
    %v103 = vld [vmem:[%s2 + $0x14] sm:$0xf]
    %v104 = vld [vmem:[%s2 + $0x18] sm:$0xf]
    %v105 = vld [vmem:[%s2 + $0x1c] sm:$0xf]
    %v106 = vld [vmem:[%s2 + $0x20] sm:$0xf]
    %v107 = vld [vmem:[%s2 + $0x24] sm:$0xf]
    %v108 = vld [vmem:[%s2 + $0x28] sm:$0xf]
    %v109 = vld [vmem:[%s2 + $0x2c] sm:$0xf]
    %v110 = vld [vmem:[%s2 + $0x30] sm:$0xf]
    %v111 = vld [vmem:[%s2 + $0x34] sm:$0xf]
    %v112 = vld [vmem:[%s2 + $0x38] sm:$0xf]
    %v113 = vld [vmem:[%s2 + $0x3c] sm:$0xf]
    %v114 = vld [vmem:[%s5] sm:$0x1]
    %v116 = vperm.slane %v114, 0
    %v134 = vunpack.c.l.b16 %v98
    %v135 = vunpack.c.l.b16 %v99
    %v136 = vunpack.c.l.b16 %v100
    %v137 = vunpack.c.l.b16 %v101
    %v138 = vunpack.c.l.b16 %v102
    %v139 = vunpack.c.l.b16 %v103
    %v140 = vunpack.c.l.b16 %v104
    %v141 = vunpack.c.l.b16 %v105
    %v142 = vunpack.c.l.b16 %v106
    %v143 = vunpack.c.l.b16 %v107
    %v144 = vunpack.c.l.b16 %v108
    %v145 = vunpack.c.l.b16 %v109
    %v146 = vunpack.c.l.b16 %v110
    %v147 = vunpack.c.l.b16 %v111
    %v148 = vunpack.c.l.b16 %v112
    %v149 = vunpack.c.l.b16 %v113
    %v150 = vpack.c.b16 %v135, %v134
    %v151 = vpack.c.b16 %v137, %v136
    %v152 = vpack.c.b16 %v139, %v138
    %v153 = vpack.c.b16 %v141, %v140
    %v154 = vpack.c.b16 %v143, %v142
    %v155 = vpack.c.b16 %v145, %v144
    %v156 = vpack.c.b16 %v147, %v146
    %v157 = vpack.c.b16 %v149, %v148
    %166 = vmatpush.bf16.msra.mxu0 %v157
    %167 = vmatpush.bf16.msra.mxu0 %v156
    %168 = vmatpush.bf16.msra.mxu0 %v155
    %169 = vmatpush.bf16.msra.mxu0 %v154
    %170 = vmatpush.bf16.msra.mxu0 %v153
    %171 = vmatpush.bf16.msra.mxu0 %v152
    %172 = vmatpush.bf16.msra.mxu0 %v151
    %173 = vmatpush.bf16.msra.mxu0 %v150
    %174 = vmatmul.bf16.gmra.mxu0 %v97
    %v175 = vpop.f32.mrf.mxu0
    %v176 = vadd.f32 %v116, %v175
    %v177 = vpop.f32.mrf.mxu0
    %178 = vdwg.mxu0
    %v179 = vmax.f32 %v176, 0.0
    %v180 = vpack.c.bf16 %v179, %v179
    %v181 = vld [vmem:[%s3] sm:$0xf]
    %v182 = vld [vmem:[%s3 + $0x4] sm:$0xf]
    %v183 = vld [vmem:[%s3 + $0x8] sm:$0xf]
    %v184 = vld [vmem:[%s3 + $0xc] sm:$0xf]
    %v185 = vld [vmem:[%s3 + $0x10] sm:$0xf]
    %v186 = vld [vmem:[%s3 + $0x14] sm:$0xf]
    %v187 = vld [vmem:[%s3 + $0x18] sm:$0xf]
    %v188 = vld [vmem:[%s3 + $0x1c] sm:$0xf]
    %v189 = vld [vmem:[%s3 + $0x20] sm:$0xf]
    %v190 = vld [vmem:[%s3 + $0x24] sm:$0xf]
    %v191 = vld [vmem:[%s3 + $0x28] sm:$0xf]
    %v192 = vld [vmem:[%s3 + $0x2c] sm:$0xf]
    %v193 = vld [vmem:[%s3 + $0x30] sm:$0xf]
    %v194 = vld [vmem:[%s3 + $0x34] sm:$0xf]
    %v195 = vld [vmem:[%s3 + $0x38] sm:$0xf]
    %v196 = vld [vmem:[%s3 + $0x3c] sm:$0xf]
    %v197 = vld [vmem:[%s6] sm:$0x1]
    %v199 = vperm.slane %v197, 0
    %v217 = vunpack.c.l.b16 %v181
    %v218 = vunpack.c.l.b16 %v182
    %v219 = vunpack.c.l.b16 %v183
    %v220 = vunpack.c.l.b16 %v184
    %v221 = vunpack.c.l.b16 %v185
    %v222 = vunpack.c.l.b16 %v186
    %v223 = vunpack.c.l.b16 %v187
    %v224 = vunpack.c.l.b16 %v188
    %v225 = vunpack.c.l.b16 %v189
    %v226 = vunpack.c.l.b16 %v190
    %v227 = vunpack.c.l.b16 %v191
    %v228 = vunpack.c.l.b16 %v192
    %v229 = vunpack.c.l.b16 %v193
    %v230 = vunpack.c.l.b16 %v194
    %v231 = vunpack.c.l.b16 %v195
    %v232 = vunpack.c.l.b16 %v196
    %v233 = vpack.c.b16 %v218, %v217
    %v234 = vpack.c.b16 %v220, %v219
    %v235 = vpack.c.b16 %v222, %v221
    %v236 = vpack.c.b16 %v224, %v223
    %v237 = vpack.c.b16 %v226, %v225
    %v238 = vpack.c.b16 %v228, %v227
    %v239 = vpack.c.b16 %v230, %v229
    %v240 = vpack.c.b16 %v232, %v231
    %249 = vmatpush.bf16.msra.mxu0 %v240
    %250 = vmatpush.bf16.msra.mxu0 %v239
    %251 = vmatpush.bf16.msra.mxu0 %v238
    %252 = vmatpush.bf16.msra.mxu0 %v237
    %253 = vmatpush.bf16.msra.mxu0 %v236
    %254 = vmatpush.bf16.msra.mxu0 %v235
    %255 = vmatpush.bf16.msra.mxu0 %v234
    %256 = vmatpush.bf16.msra.mxu0 %v233
    %257 = vmatmul.bf16.gmra.mxu0 %v180
    %v258 = vpop.f32.mrf.mxu0
    %v259 = vadd.f32 %v199, %v258
    %v260 = vpop.f32.mrf.mxu0
    %261 = vdwg.mxu0
    %vm262 = vcmask 31744
    %263 = vst.msk [vmem:[%s7] sm:$0xff] %vm262, %v259
    // Predicated region
    $region38: #{tpu_custom_call.1} parent=1 // pred_check
      _
    $region39: #{tpu_custom_call.1} parent=1 // pred_check_branch
      %265 = sbr.rel (0) target = $region41
    $region40: #{tpu_custom_call.1} parent=1 // pred_region
      _
    $region41: #{tpu_custom_call.1} parent=1 // pred_fallthru
      _
    // Predicated region
    $region42: #{tpu_custom_call.1} parent=1 // pred_check
      _
    $region43: #{tpu_custom_call.1} parent=1 // pred_check_branch
      %267 = sbr.rel (0) target = $region45
    $region44: #{tpu_custom_call.1} parent=1 // pred_region
      _
    $region45: #{tpu_custom_call.1} parent=1 // pred_fallthru
      _
    %268 = vsyncpa [#allocation3], 1
    %269 = vsyncpa [#allocation5], 1

</llo_original>
